<compile_context>
chip_gen: v5e
topology: v5e:2x2
jax: 0.10.0
libtpu: 0.0.40
codegen_flags: <defaults>
</compile_context>

<pallas_src>
import math

import jax
import jax.numpy as jnp
from jax.experimental import pallas as pl
from jax.experimental.pallas import tpu as pltpu

LEAKY_SLOPE = 0.01
BN_EPS = 1e-5
LANE = 128


# ---------------------------------------------------------------------------
# Pallas kernel: fused residual block on a (TM, C) row tile.
# ---------------------------------------------------------------------------
def _resblock_kernel(x_ref, w1_ref, b1_ref, w2_ref, b2_ref, ws_ref, bs_ref, o_ref):
    # x_ref : (TM, Cin)   channels-last pixel rows
    # w1_ref: (Cin, CP)   conv1 (+bn1 folded), transposed, Cout padded to CP lanes
    # w2_ref: (CP, CP)    conv2 (+bn2 folded), transposed, padded
    # ws_ref: (Cin, CP)   skip conv (+bn folded) or identity, transposed, padded
    # b*_ref: (1, CP)
    # o_ref : (TM, CP)
    x = x_ref[...]

    h = jnp.dot(x, w1_ref[...], preferred_element_type=jnp.float32) + b1_ref[...]
    h = jnp.where(h > 0, h, LEAKY_SLOPE * h)                       # LeakyReLU

    out = jnp.dot(h, w2_ref[...], preferred_element_type=jnp.float32) + b2_ref[...]
    res = jnp.dot(x, ws_ref[...], preferred_element_type=jnp.float32) + bs_ref[...]

    out = out + res
    o_ref[...] = jnp.where(out > 0, out, LEAKY_SLOPE * out)        # LeakyReLU


# ---------------------------------------------------------------------------
# Wrapper: fold BN into convs, lay out data, call the kernel.
# ---------------------------------------------------------------------------
def _fold_conv_bn(w, b, gamma, beta, mean, var):
    # w: (Cout, Cin), b: (Cout,) ; returns BN-folded weight/bias
    scale = gamma / jnp.sqrt(var + BN_EPS)
    return w * scale[:, None], (b - mean) * scale + beta


def _pad_cols(a, cp):
    return jnp.pad(a, ((0, 0), (0, cp - a.shape[1])))


def residual_block_forward(x, params):
    """x: (N, Cin, H, W) float32 -> (N, Cout, H, W) float32."""
    N, Cin, H, W = x.shape

    w1, b1 = _fold_conv_bn(params["conv1_w"], params["conv1_b"], *params["bn1"])
    w2, b2 = _fold_conv_bn(params["conv2_w"], params["conv2_b"], *params["bn2"])
    Cout = w1.shape[0]

    if "skip_w" in params:
        ws, bs = _fold_conv_bn(params["skip_w"], params["skip_b"], *params["skip_bn"])
    else:
        # identity skip (in_channels == out_channels) expressed as an identity matmul
        ws = jnp.eye(Cout, Cin, dtype=jnp.float32)
        bs = jnp.zeros((Cout,), jnp.float32)

    # Pad the output-channel dim to a full lane width (128) with zeros.
    CP = ((Cout + LANE - 1) // LANE) * LANE
    w1t = _pad_cols(w1.T.astype(jnp.float32), CP)                       # (Cin, CP)
    w2t = jnp.pad(w2.T.astype(jnp.float32),
                  ((0, CP - Cout), (0, CP - Cout)))                     # (CP, CP)
    wst = _pad_cols(ws.T.astype(jnp.float32), CP)                       # (Cin, CP)
    b1p = _pad_cols(b1.reshape(1, -1).astype(jnp.float32), CP)          # (1, CP)
    b2p = _pad_cols(b2.reshape(1, -1).astype(jnp.float32), CP)
    bsp = _pad_cols(bs.reshape(1, -1).astype(jnp.float32), CP)

    # Channels-last pixel rows: (M, Cin) with M = N*H*W.
    M = N * H * W
    x2d = jnp.transpose(x, (0, 2, 3, 1)).reshape(M, Cin).astype(jnp.float32)

    # Row tile: multiple of 8 sublanes; pad M up to a multiple of the tile.
    TM = 256 if M >= 256 else max(8, ((M + 7) // 8) * 8)
    Mp = ((M + TM - 1) // TM) * TM
    if Mp != M:
        x2d = jnp.pad(x2d, ((0, Mp - M), (0, 0)))

    out = pl.pallas_call(
        _resblock_kernel,
        out_shape=jax.ShapeDtypeStruct((Mp, CP), jnp.float32),
        grid=(Mp // TM,),
        in_specs=[
            pl.BlockSpec((TM, Cin), lambda i: (i, 0)),   # x rows (tiled)
            pl.BlockSpec((Cin, CP), lambda i: (0, 0)),   # w1
            pl.BlockSpec((1, CP), lambda i: (0, 0)),     # b1
            pl.BlockSpec((CP, CP), lambda i: (0, 0)),    # w2
            pl.BlockSpec((1, CP), lambda i: (0, 0)),     # b2
            pl.BlockSpec((Cin, CP), lambda i: (0, 0)),   # w_skip
            pl.BlockSpec((1, CP), lambda i: (0, 0)),     # b_skip
        ],
        out_specs=pl.BlockSpec((TM, CP), lambda i: (i, 0)),
        compiler_params=pltpu.CompilerParams(
            dimension_semantics=("parallel",)),
    )(x2d, w1t, b1p, w2t, b2p, wst, bsp)

    y = out[:M, :Cout].reshape(N, H, W, Cout)
    return jnp.transpose(y, (0, 3, 1, 2))                # (N, Cout, H, W)


# ---------------------------------------------------------------------------
# Pure-JAX reference (unfolded conv + BN) for correctness checking.
# ---------------------------------------------------------------------------
def _bn_ref(x, gamma, beta, mean, var):
    inv = 1.0 / jnp.sqrt(var + BN_EPS)
    return (x - mean[None, :, None, None]) * (gamma * inv)[None, :, None, None] \
        + beta[None, :, None, None]


def _conv1x1_ref(x, w, b):
    return jnp.einsum("nchw,oc->nohw", x, w) + b[None, :, None, None]


def reference_forward(x, params):
    out = _conv1x1_ref(x, params["conv1_w"], params["conv1_b"])
    out = _bn_ref(out, *params["bn1"])
    out = jnp.where(out > 0, out, LEAKY_SLOPE * out)
    out = _conv1x1_ref(out, params["conv2_w"], params["conv2_b"])
    out = _bn_ref(out, *params["bn2"])
    if "skip_w" in params:
        res = _conv1x1_ref(x, params["skip_w"], params["skip_b"])
        res = _bn_ref(res, *params["skip_bn"])
    else:
        res = x
    out = out + res
    return jnp.where(out > 0, out, LEAKY_SLOPE * out)


# ---------------------------------------------------------------------------
# Parameter initialization (PyTorch-like uniform fan-in bounds; BN non-trivial).
# ---------------------------------------------------------------------------
def _uniform(key, shape, fan_in):
    bound = 1.0 / math.sqrt(fan_in)
    return jax.random.uniform(key, shape, jnp.float32, -bound, bound)


def _bn_init(key, c):
    k1, k2, k3, k4 = jax.random.split(key, 4)
    gamma = 1.0 + 0.1 * jax.random.normal(k1, (c,), jnp.float32)
    beta = 0.1 * jax.random.normal(k2, (c,), jnp.float32)
    mean = 0.1 * jax.random.normal(k3, (c,), jnp.float32)
    var = 1.0 + 0.1 * jnp.abs(jax.random.normal(k4, (c,), jnp.float32))
    return (gamma, beta, mean, var)


def init_params(key, c_in, c_out):
    ks = jax.random.split(key, 9)
    params = dict(
        conv1_w=_uniform(ks[0], (c_out, c_in), c_in),
        conv1_b=_uniform(ks[1], (c_out,), c_in),
        bn1=_bn_init(ks[2], c_out),
        conv2_w=_uniform(ks[3], (c_out, c_out), c_out),
        conv2_b=_uniform(ks[4], (c_out,), c_out),
        bn2=_bn_init(ks[5], c_out),
    )
    if c_in != c_out:
        params["skip_w"] = _uniform(ks[6], (c_out, c_in), c_in)
        params["skip_b"] = _uniform(ks[7], (c_out,), c_in)
        params["skip_bn"] = _bn_init(ks[8], c_out)
    return params


if __name__ == "__main__":
    key = jax.random.PRNGKey(0)
    pkey, xkey = jax.random.split(key)

    N, Cin, H, W = 2, 4, 16, 16
    Cout = 8
    params = init_params(pkey, Cin, Cout)
    x = jax.random.normal(xkey, (N, Cin, H, W), jnp.float32)

    y = residual_block_forward(x, params)
    y = jax.block_until_ready(y)

    y_ref = reference_forward(x, params)
    assert y.shape == (N, Cout, H, W), y.shape
    assert bool(jnp.all(jnp.isfinite(y)))
    assert bool(jnp.allclose(y, y_ref, atol=1e-4, rtol=1e-4)), \
        float(jnp.max(jnp.abs(y - y_ref)))
    print("KERNEL_OK")
</pallas_src>

<mosaic_0001>
module attributes {stable_mosaic.version = 11 : i64} {
  func.func @_resblock_kernel(%arg0: i32, %arg1: memref<256x4xf32, #tpu.memory_space<vmem>>, %arg2: memref<4x128xf32, #tpu.memory_space<vmem>>, %arg3: memref<1x128xf32, #tpu.memory_space<vmem>>, %arg4: memref<128x128xf32, #tpu.memory_space<vmem>>, %arg5: memref<1x128xf32, #tpu.memory_space<vmem>>, %arg6: memref<4x128xf32, #tpu.memory_space<vmem>>, %arg7: memref<1x128xf32, #tpu.memory_space<vmem>>, %arg8: memref<256x128xf32, #tpu.memory_space<vmem>>) attributes {dimension_semantics = [#tpu.dimension_semantics<parallel>], iteration_bounds = array<i64: 2>, scalar_prefetch = 0 : i64, scratch_operands = 0 : i64, tpu.core_type = #tpu.core_type<tc>, window_params = [{transform_indices = @transform_0, window_bounds = array<i64: 256, 4>}, {pipeline_mode = #tpu.pipeline_mode<synchronous>, transform_indices = @transform_1, window_bounds = array<i64: 4, 128>}, {pipeline_mode = #tpu.pipeline_mode<synchronous>, transform_indices = @transform_2, window_bounds = array<i64: 1, 128>}, {pipeline_mode = #tpu.pipeline_mode<synchronous>, transform_indices = @transform_3, window_bounds = array<i64: 128, 128>}, {pipeline_mode = #tpu.pipeline_mode<synchronous>, transform_indices = @transform_4, window_bounds = array<i64: 1, 128>}, {pipeline_mode = #tpu.pipeline_mode<synchronous>, transform_indices = @transform_5, window_bounds = array<i64: 4, 128>}, {pipeline_mode = #tpu.pipeline_mode<synchronous>, transform_indices = @transform_6, window_bounds = array<i64: 1, 128>}, {transform_indices = @transform_7, window_bounds = array<i64: 256, 128>}]} {
    %c0 = arith.constant 0 : index
    %c0_0 = arith.constant 0 : index
    %0 = vector.load %arg1[%c0, %c0_0] : memref<256x4xf32, #tpu.memory_space<vmem>>, vector<256x4xf32>
    %c0_1 = arith.constant 0 : index
    %c0_2 = arith.constant 0 : index
    %1 = vector.load %arg2[%c0_1, %c0_2] : memref<4x128xf32, #tpu.memory_space<vmem>>, vector<4x128xf32>
    %cst = arith.constant dense<0.000000e+00> : vector<256x128xf32>
    %2 = tpu.matmul %0, %1, %cst {dimension_numbers = #tpu.dot_dimension_numbers<[1], [0], [0], [1], [0, 0, 1, 1], [], []>} : vector<256x4xf32>, vector<4x128xf32>, vector<256x128xf32> -> vector<256x128xf32>
    %c0_3 = arith.constant 0 : index
    %c0_4 = arith.constant 0 : index
    %3 = vector.load %arg3[%c0_3, %c0_4] : memref<1x128xf32, #tpu.memory_space<vmem>>, vector<1x128xf32>
    %4 = vector.broadcast %3 : vector<1x128xf32> to vector<256x128xf32>
    %5 = arith.addf %2, %4 : vector<256x128xf32>
    %cst_5 = arith.constant 0.000000e+00 : f32
    %6 = vector.broadcast %cst_5 : f32 to vector<256x128xf32>
    %7 = arith.cmpf ogt, %5, %6 : vector<256x128xf32>
    %cst_6 = arith.constant 0.00999999977 : f32
    %8 = vector.broadcast %cst_6 : f32 to vector<256x128xf32>
    %9 = arith.mulf %8, %5 : vector<256x128xf32>
    %10 = arith.select %7, %5, %9 : vector<256x128xi1>, vector<256x128xf32>
    %c0_7 = arith.constant 0 : index
    %c0_8 = arith.constant 0 : index
    %11 = vector.load %arg4[%c0_7, %c0_8] : memref<128x128xf32, #tpu.memory_space<vmem>>, vector<128x128xf32>
    %cst_9 = arith.constant dense<0.000000e+00> : vector<256x128xf32>
    %12 = tpu.matmul %10, %11, %cst_9 {dimension_numbers = #tpu.dot_dimension_numbers<[1], [0], [0], [1], [0, 0, 1, 1], [], []>} : vector<256x128xf32>, vector<128x128xf32>, vector<256x128xf32> -> vector<256x128xf32>
    %c0_10 = arith.constant 0 : index
    %c0_11 = arith.constant 0 : index
    %13 = vector.load %arg5[%c0_10, %c0_11] : memref<1x128xf32, #tpu.memory_space<vmem>>, vector<1x128xf32>
    %14 = vector.broadcast %13 : vector<1x128xf32> to vector<256x128xf32>
    %15 = arith.addf %12, %14 : vector<256x128xf32>
    %c0_12 = arith.constant 0 : index
    %c0_13 = arith.constant 0 : index
    %16 = vector.load %arg6[%c0_12, %c0_13] : memref<4x128xf32, #tpu.memory_space<vmem>>, vector<4x128xf32>
    %cst_14 = arith.constant dense<0.000000e+00> : vector<256x128xf32>
    %17 = tpu.matmul %0, %16, %cst_14 {dimension_numbers = #tpu.dot_dimension_numbers<[1], [0], [0], [1], [0, 0, 1, 1], [], []>} : vector<256x4xf32>, vector<4x128xf32>, vector<256x128xf32> -> vector<256x128xf32>
    %c0_15 = arith.constant 0 : index
    %c0_16 = arith.constant 0 : index
    %18 = vector.load %arg7[%c0_15, %c0_16] : memref<1x128xf32, #tpu.memory_space<vmem>>, vector<1x128xf32>
    %19 = vector.broadcast %18 : vector<1x128xf32> to vector<256x128xf32>
    %20 = arith.addf %17, %19 : vector<256x128xf32>
    %21 = arith.addf %15, %20 : vector<256x128xf32>
    %cst_17 = arith.constant 0.000000e+00 : f32
    %22 = vector.broadcast %cst_17 : f32 to vector<256x128xf32>
    %23 = arith.cmpf ogt, %21, %22 : vector<256x128xf32>
    %cst_18 = arith.constant 0.00999999977 : f32
    %24 = vector.broadcast %cst_18 : f32 to vector<256x128xf32>
    %25 = arith.mulf %24, %21 : vector<256x128xf32>
    %26 = arith.select %23, %21, %25 : vector<256x128xi1>, vector<256x128xf32>
    %c0_19 = arith.constant 0 : index
    %c0_20 = arith.constant 0 : index
    %27 = vector.load %arg8[%c0_19, %c0_20] : memref<256x128xf32, #tpu.memory_space<vmem>>, vector<256x128xf32>
    tpu.vector_store %arg8[%c0_19, %c0_20], %26 {strides = array<i32>} : memref<256x128xf32, #tpu.memory_space<vmem>>, vector<256x128xf32>,
    return
  }
  func.func @transform_0(%arg0: i32) -> (i32, i32) {
    %c0_i32 = arith.constant 0 : i32
    %c0_i32_0 = arith.constant 0 : i32
    return %arg0, %c0_i32 : i32, i32
  }
  func.func @transform_1(%arg0: i32) -> (i32, i32) {
    %c0_i32 = arith.constant 0 : i32
    %c0_i32_0 = arith.constant 0 : i32
    %c0_i32_1 = arith.constant 0 : i32
    return %c0_i32, %c0_i32_0 : i32, i32
  }
  func.func @transform_2(%arg0: i32) -> (i32, i32) {
    %c0_i32 = arith.constant 0 : i32
    %c0_i32_0 = arith.constant 0 : i32
    %c0_i32_1 = arith.constant 0 : i32
    return %c0_i32, %c0_i32_0 : i32, i32
  }
  func.func @transform_3(%arg0: i32) -> (i32, i32) {
    %c0_i32 = arith.constant 0 : i32
    %c0_i32_0 = arith.constant 0 : i32
    %c0_i32_1 = arith.constant 0 : i32
    return %c0_i32, %c0_i32_0 : i32, i32
  }
  func.func @transform_4(%arg0: i32) -> (i32, i32) {
    %c0_i32 = arith.constant 0 : i32
    %c0_i32_0 = arith.constant 0 : i32
    %c0_i32_1 = arith.constant 0 : i32
    return %c0_i32, %c0_i32_0 : i32, i32
  }
  func.func @transform_5(%arg0: i32) -> (i32, i32) {
    %c0_i32 = arith.constant 0 : i32
    %c0_i32_0 = arith.constant 0 : i32
    %c0_i32_1 = arith.constant 0 : i32
    return %c0_i32, %c0_i32_0 : i32, i32
  }
  func.func @transform_6(%arg0: i32) -> (i32, i32) {
    %c0_i32 = arith.constant 0 : i32
    %c0_i32_0 = arith.constant 0 : i32
    %c0_i32_1 = arith.constant 0 : i32
    return %c0_i32, %c0_i32_0 : i32, i32
  }
  func.func @transform_7(%arg0: i32) -> (i32, i32) {
    %c0_i32 = arith.constant 0 : i32
    %c0_i32_0 = arith.constant 0 : i32
    return %arg0, %c0_i32 : i32, i32
  }
}

</mosaic_0001>

<llo_original>
// kernel: tpu_custom_call.1
$region0: #{tpu_custom_call.1}
  #allocation0 [shape = 'u32[]', space=smem, size = 0x4, offset = 0x4, fixed_abs, tag = 'smem constant byte address 0x4 - core index']
  #allocation1 [shape = 'u32[72,128]{1,0:T(1,128)}', space=vmem, size = 0x9000, scoped, tag = 'internal scratch']
  %s0 = inlined_call_operand.vmem [shape: f32[512,4], index: 0, kind: input, shape index: {}]
  %s1 = inlined_call_operand.vmem [shape: f32[4,128], index: 1, kind: input, shape index: {}]
  %s2 = inlined_call_operand.vmem [shape: f32[1,128], index: 2, kind: input, shape index: {}]
  %s3 = inlined_call_operand.vmem [shape: f32[128,128], index: 3, kind: input, shape index: {}]
  %s4 = inlined_call_operand.vmem [shape: f32[1,128], index: 4, kind: input, shape index: {}]
  %s5 = inlined_call_operand.vmem [shape: f32[4,128], index: 5, kind: input, shape index: {}]
  %s6 = inlined_call_operand.vmem [shape: f32[1,128], index: 6, kind: input, shape index: {}]
  %s7 = inlined_call_operand.hbm [shape: f32[512,128], index: 7, kind: output, shape index: {}]
  %s8 = sld [smem:[#allocation0]]
  $region61: #{tpu_custom_call.1} parent=0
    _
  %s10 = ssub.s32 1, %s8
  %s11 = scalar_select 0, %s10, %s8
  $region1: #{tpu_custom_call.1} parent=0
    #allocation2 [shape = 'u8[262144]{0}', space=vmem, size = 0x40000, scoped, tag = 'output window, operand 0']
    #allocation3 [shape = 's32[2]{0}', space=sflag, size = 0x8, scoped, tag = 'scoped memory for tpu_custom_call.1']
    %12 = vsyncpa [#allocation3], 0
    %s13 = scalar_lea.sflag [#allocation3], 1
    %14 = vsyncpa %s13, 0
    loop: start=0, step=1, limit=4
    $region2: #{tpu_custom_call.1} parent=1 // loop_pre_header
      _
    $region3: #{tpu_custom_call.1} parent=1 // loop_header
      %s16 = sphi 0, %s20
      %p17 = scmp.ge.s32.totalorder %s16, 4
      %s26 = sphi 0, %s28
      %s29 = sphi 0, %s26
      %s30 = sphi 0, %s29
      %s46 = sphi 0, %s30
      %s50 = sphi 0, %s50
      %s52 = sphi 0, %s50
      %s53 = sphi 0, %s52
      %s67 = sphi 0, %s53
      %s71 = sphi 0, %s71
      %s73 = sphi 0, %s71
      %s74 = sphi 0, %s73
      %s88 = sphi 0, %s74
      %s92 = sphi 0, %s92
      %s94 = sphi 0, %s92
      %s95 = sphi 0, %s94
      %s109 = sphi 0, %s95
      %s113 = sphi 0, %s113
      %s115 = sphi 0, %s113
      %s116 = sphi 0, %s115
      %s130 = sphi 0, %s116
      %s134 = sphi 0, %s134
      %s136 = sphi 0, %s134
      %s137 = sphi 0, %s136
      %s151 = sphi 0, %s137
      %s155 = sphi 0, %s155
      %s157 = sphi 0, %s155
      %s158 = sphi 0, %s157
      %s172 = sphi 0, %s158
      %s178 = sphi 0, %s180
      %s181 = sphi 0, %s178
      %s182 = sphi 0, %s181
      %s198 = sphi 0, %s182
    $region4: #{tpu_custom_call.1} parent=1 // loop_header_branch
      %19 = sbr.rel (%p17) target = $region8
    $region5: #{tpu_custom_call.1} parent=1 // loop_body
      %s21 = ssub.s32 %s16, 1
      %s22 = ssub.s32 %s16, 2
      %s23 = sadd.s32 %s16, 1
      %s24 = ssub.s32 %s16, %s23
      %p25 = scmp.eq.s32.totalorder %s24, 0
      %s27 = sadd.s32 %s26, 1
      %s28 = scalar_select %p25, %s26, %s27
      %p31 = pneg %p25
      %p32 = scmp.eq.s32.totalorder %s16, 1
      %p33 = por %p31, %p32
      %p34 = scmp.ne.s32.totalorder %s26, %s29
      %p35 = scmp.eq.s32.totalorder %s16, 0
      %p36 = por %p34, %p35
      %p37 = scmp.ne.s32.totalorder %s26, %s29
      %p38 = scmp.eq.s32.totalorder %s21, 1
      %p39 = por %p37, %p38
      %p40 = scmp.ne.s32.totalorder %s29, %s30
      %p41 = scmp.eq.s32.totalorder %s21, 0
      %p42 = por %p40, %p41
      %p43 = scmp.ne.s32.totalorder %s29, %s30
      %p44 = scmp.eq.s32.totalorder %s22, 1
      %p45 = por %p43, %p44
      %p47 = scmp.ne.s32.totalorder %s30, %s46
      %p48 = scmp.eq.s32.totalorder %s22, 0
      %p49 = por %p47, %p48
      %s51 = sadd.s32 %s50, 1
      %p54 = scmp.eq.s32.totalorder %s16, 1
      %p55 = scmp.ne.s32.totalorder %s50, %s52
      %p56 = scmp.eq.s32.totalorder %s16, 0
      %p57 = por %p55, %p56
      %p58 = scmp.ne.s32.totalorder %s50, %s52
      %p59 = scmp.eq.s32.totalorder %s21, 1
      %p60 = por %p58, %p59
      %p61 = scmp.ne.s32.totalorder %s52, %s53
      %p62 = scmp.eq.s32.totalorder %s21, 0
      %p63 = por %p61, %p62
      %p64 = scmp.ne.s32.totalorder %s52, %s53
      %p65 = scmp.eq.s32.totalorder %s22, 1
      %p66 = por %p64, %p65
      %p68 = scmp.ne.s32.totalorder %s53, %s67
      %p69 = scmp.eq.s32.totalorder %s22, 0
      %p70 = por %p68, %p69
      %s72 = sadd.s32 %s71, 1
      %p75 = scmp.eq.s32.totalorder %s16, 1
      %p76 = scmp.ne.s32.totalorder %s71, %s73
      %p77 = scmp.eq.s32.totalorder %s16, 0
      %p78 = por %p76, %p77
      %p79 = scmp.ne.s32.totalorder %s71, %s73
      %p80 = scmp.eq.s32.totalorder %s21, 1
      %p81 = por %p79, %p80
      %p82 = scmp.ne.s32.totalorder %s73, %s74
      %p83 = scmp.eq.s32.totalorder %s21, 0
      %p84 = por %p82, %p83
      %p85 = scmp.ne.s32.totalorder %s73, %s74
      %p86 = scmp.eq.s32.totalorder %s22, 1
      %p87 = por %p85, %p86
      %p89 = scmp.ne.s32.totalorder %s74, %s88
      %p90 = scmp.eq.s32.totalorder %s22, 0
      %p91 = por %p89, %p90
      %s93 = sadd.s32 %s92, 1
      %p96 = scmp.eq.s32.totalorder %s16, 1
      %p97 = scmp.ne.s32.totalorder %s92, %s94
      %p98 = scmp.eq.s32.totalorder %s16, 0
      %p99 = por %p97, %p98
      %p100 = scmp.ne.s32.totalorder %s92, %s94
      %p101 = scmp.eq.s32.totalorder %s21, 1
      %p102 = por %p100, %p101
      %p103 = scmp.ne.s32.totalorder %s94, %s95
      %p104 = scmp.eq.s32.totalorder %s21, 0
      %p105 = por %p103, %p104
      %p106 = scmp.ne.s32.totalorder %s94, %s95
      %p107 = scmp.eq.s32.totalorder %s22, 1
      %p108 = por %p106, %p107
      %p110 = scmp.ne.s32.totalorder %s95, %s109
      %p111 = scmp.eq.s32.totalorder %s22, 0
      %p112 = por %p110, %p111
      %s114 = sadd.s32 %s113, 1
      %p117 = scmp.eq.s32.totalorder %s16, 1
      %p118 = scmp.ne.s32.totalorder %s113, %s115
      %p119 = scmp.eq.s32.totalorder %s16, 0
      %p120 = por %p118, %p119
      %p121 = scmp.ne.s32.totalorder %s113, %s115
      %p122 = scmp.eq.s32.totalorder %s21, 1
      %p123 = por %p121, %p122
      %p124 = scmp.ne.s32.totalorder %s115, %s116
      %p125 = scmp.eq.s32.totalorder %s21, 0
      %p126 = por %p124, %p125
      %p127 = scmp.ne.s32.totalorder %s115, %s116
      %p128 = scmp.eq.s32.totalorder %s22, 1
      %p129 = por %p127, %p128
      %p131 = scmp.ne.s32.totalorder %s116, %s130
      %p132 = scmp.eq.s32.totalorder %s22, 0
      %p133 = por %p131, %p132
      %s135 = sadd.s32 %s134, 1
      %p138 = scmp.eq.s32.totalorder %s16, 1
      %p139 = scmp.ne.s32.totalorder %s134, %s136
      %p140 = scmp.eq.s32.totalorder %s16, 0
      %p141 = por %p139, %p140
      %p142 = scmp.ne.s32.totalorder %s134, %s136
      %p143 = scmp.eq.s32.totalorder %s21, 1
      %p144 = por %p142, %p143
      %p145 = scmp.ne.s32.totalorder %s136, %s137
      %p146 = scmp.eq.s32.totalorder %s21, 0
      %p147 = por %p145, %p146
      %p148 = scmp.ne.s32.totalorder %s136, %s137
      %p149 = scmp.eq.s32.totalorder %s22, 1
      %p150 = por %p148, %p149
      %p152 = scmp.ne.s32.totalorder %s137, %s151
      %p153 = scmp.eq.s32.totalorder %s22, 0
      %p154 = por %p152, %p153
      %s156 = sadd.s32 %s155, 1
      %p159 = scmp.eq.s32.totalorder %s16, 1
      %p160 = scmp.ne.s32.totalorder %s155, %s157
      %p161 = scmp.eq.s32.totalorder %s16, 0
      %p162 = por %p160, %p161
      %p163 = scmp.ne.s32.totalorder %s155, %s157
      %p164 = scmp.eq.s32.totalorder %s21, 1
      %p165 = por %p163, %p164
      %p166 = scmp.ne.s32.totalorder %s157, %s158
      %p167 = scmp.eq.s32.totalorder %s21, 0
      %p168 = por %p166, %p167
      %p169 = scmp.ne.s32.totalorder %s157, %s158
      %p170 = scmp.eq.s32.totalorder %s22, 1
      %p171 = por %p169, %p170
      %p173 = scmp.ne.s32.totalorder %s158, %s172
      %p174 = scmp.eq.s32.totalorder %s22, 0
      %p175 = por %p173, %p174
      %s176 = ssub.s32 %s16, %s23
      %p177 = scmp.eq.s32.totalorder %s176, 0
      %s179 = sadd.s32 %s178, 1
      %s180 = scalar_select %p177, %s178, %s179
      %p183 = pneg %p177
      %p184 = scmp.eq.s32.totalorder %s16, 1
      %p185 = por %p183, %p184
      %p186 = scmp.ne.s32.totalorder %s178, %s181
      %p187 = scmp.eq.s32.totalorder %s16, 0
      %p188 = por %p186, %p187
      %p189 = scmp.ne.s32.totalorder %s178, %s181
      %p190 = scmp.eq.s32.totalorder %s21, 1
      %p191 = por %p189, %p190
      %p192 = scmp.ne.s32.totalorder %s181, %s182
      %p193 = scmp.eq.s32.totalorder %s21, 0
      %p194 = por %p192, %p193
      %p195 = scmp.ne.s32.totalorder %s181, %s182
      %p196 = scmp.eq.s32.totalorder %s22, 1
      %p197 = por %p195, %p196
      %p199 = scmp.ne.s32.totalorder %s182, %s198
      %p200 = scmp.eq.s32.totalorder %s22, 0
      %p201 = por %p199, %p200
      %p202 = scmp.le.s32.totalorder 1, %s16
      %p203 = scmp.lt.s32.totalorder %s16, 3
      %p204 = pnand %p202, %p203
      %p205 = pneg %p204
      // Predicated region
      $region9: #{tpu_custom_call.1} parent=5 // pred_check
        _
      $region10: #{tpu_custom_call.1} parent=5 // pred_check_branch
        %207 = sbr.rel (%p204) target = $region12
      $region11: #{tpu_custom_call.1} parent=5 // pred_region
        %s208 = ssub.s32 %s16, 1
        // Predicated region
        $region13: #{tpu_custom_call.1} parent=11 // pred_check
          %p209 = pneg %p63
        $region14: #{tpu_custom_call.1} parent=11 // pred_check_branch
          %211 = sbr.rel (%p209) target = $region16
        $region15: #{tpu_custom_call.1} parent=11 // pred_region
          _
        $region16: #{tpu_custom_call.1} parent=11 // pred_fallthru
          _
        // Predicated region
        $region17: #{tpu_custom_call.1} parent=11 // pred_check
          %p212 = pneg %p84
        $region18: #{tpu_custom_call.1} parent=11 // pred_check_branch
          %214 = sbr.rel (%p212) target = $region20
        $region19: #{tpu_custom_call.1} parent=11 // pred_region
          _
        $region20: #{tpu_custom_call.1} parent=11 // pred_fallthru
          _
        // Predicated region
        $region21: #{tpu_custom_call.1} parent=11 // pred_check
          %p215 = pneg %p105
        $region22: #{tpu_custom_call.1} parent=11 // pred_check_branch
          %217 = sbr.rel (%p215) target = $region24
        $region23: #{tpu_custom_call.1} parent=11 // pred_region
          _
        $region24: #{tpu_custom_call.1} parent=11 // pred_fallthru
          _
        // Predicated region
        $region25: #{tpu_custom_call.1} parent=11 // pred_check
          %p218 = pneg %p126
        $region26: #{tpu_custom_call.1} parent=11 // pred_check_branch
          %220 = sbr.rel (%p218) target = $region28
        $region27: #{tpu_custom_call.1} parent=11 // pred_region
          _
        $region28: #{tpu_custom_call.1} parent=11 // pred_fallthru
          _
        // Predicated region
        $region29: #{tpu_custom_call.1} parent=11 // pred_check
          %p221 = pneg %p147
        $region30: #{tpu_custom_call.1} parent=11 // pred_check_branch
          %223 = sbr.rel (%p221) target = $region32
        $region31: #{tpu_custom_call.1} parent=11 // pred_region
          _
        $region32: #{tpu_custom_call.1} parent=11 // pred_fallthru
          _
        // Predicated region
        $region33: #{tpu_custom_call.1} parent=11 // pred_check
          %p224 = pneg %p168
        $region34: #{tpu_custom_call.1} parent=11 // pred_check_branch
          %226 = sbr.rel (%p224) target = $region36
        $region35: #{tpu_custom_call.1} parent=11 // pred_region
          _
        $region36: #{tpu_custom_call.1} parent=11 // pred_fallthru
          _
      $region12: #{tpu_custom_call.1} parent=5 // pred_fallthru
        _
      %p227 = scmp.lt.s32.totalorder %s16, 2
      // Predicated region
      $region37: #{tpu_custom_call.1} parent=5 // pred_check
        %p228 = pneg %p227
      $region38: #{tpu_custom_call.1} parent=5 // pred_check_branch
        %230 = sbr.rel (%p228) target = $region40
      $region39: #{tpu_custom_call.1} parent=5 // pred_region
        // Predicated region
        $region41: #{tpu_custom_call.1} parent=39 // pred_check
          %p231 = pneg %p36
        $region42: #{tpu_custom_call.1} parent=39 // pred_check_branch
          %233 = sbr.rel (%p231) target = $region44
        $region43: #{tpu_custom_call.1} parent=39 // pred_region
          %s234 = smul.u32 32, %s16
          %p235 = scmp.lt.s32.totalorder %s234, 63
          %s236 = scalar_select %p235, %s234, 63
          %s237 = smul.addr %s236, 8
          %s238 = scalar_lea.vmem %s0, %s237
          %s239 = smul.u32 32, %s16
        $region44: #{tpu_custom_call.1} parent=39 // pred_fallthru
          _
      $region40: #{tpu_custom_call.1} parent=5 // pred_fallthru
        _
      %p240 = scmp.le.s32.totalorder 1, %s16
      %p241 = scmp.lt.s32.totalorder %s16, 3
      %p242 = pnand %p240, %p241
      %p243 = pneg %p242
      // Predicated region
      $region45: #{tpu_custom_call.1} parent=5 // pred_check
        _
      $region46: #{tpu_custom_call.1} parent=5 // pred_check_branch
        %245 = sbr.rel (%p242) target = $region48
      $region47: #{tpu_custom_call.1} parent=5 // pred_region
        %s246 = ssub.s32 %s16, 1
        %s247 = smul.u32 32, %s21
        %p248 = scmp.lt.s32.totalorder %s247, 63
        %s249 = scalar_select %p248, %s247, 63
        %s250 = smul.addr %s249, 8
        %s251 = scalar_lea.vmem %s0, %s250
        %p252 = pneg %p42
        %p253 = pneg %p39
        %p254 = pneg %p63
        %p255 = pneg %p60
        %p256 = pneg %p84
        %p257 = pneg %p81
        %p258 = pneg %p105
        %p259 = pneg %p102
        %p260 = pneg %p126
        %p261 = pneg %p123
        %p262 = pneg %p147
        %p263 = pneg %p144
        %p264 = pneg %p168
        %p265 = pneg %p165
        %p266 = pneg %p194
        %p267 = pneg %p191
        %s268 = sand.u32 %s181, 1
        %s269 = scalar_lea.sflag [#allocation3], %s268
        %s270 = sand.u32 %s181, 1
        %s271 = smul.addr %s270, 256
        %s272 = scalar_lea.vmem [#allocation2], %s271
        %s273 = smul.u32 32, %s21
        %p274 = scmp.lt.s32.totalorder %s273, 63
        %s275 = scalar_select %p274, %s273, 63
        %s276 = smul.addr %s275, 8
        %s277 = scalar_lea.vmem %s0, %s276
        %s278 = smul.u32 32, %s21
        %s279 = smul.u32 32, %s21
        %v280 = vld [vmem:[%s277] sm:$0xff]
        %v281 = vld [vmem:[%s277 + $0x8] sm:$0xff]
        %v282 = vld [vmem:[%s277 + $0x10] sm:$0xff]
        %v283 = vld [vmem:[%s277 + $0x18] sm:$0xff]
        %v284 = vld [vmem:[%s277 + $0x20] sm:$0xff]
        %v285 = vld [vmem:[%s277 + $0x28] sm:$0xff]
        %v286 = vld [vmem:[%s277 + $0x30] sm:$0xff]
        %v287 = vld [vmem:[%s277 + $0x38] sm:$0xff]
        %v288 = vld [vmem:[%s277 + $0x40] sm:$0xff]
        %v289 = vld [vmem:[%s277 + $0x48] sm:$0xff]
        %v290 = vld [vmem:[%s277 + $0x50] sm:$0xff]
        %v291 = vld [vmem:[%s277 + $0x58] sm:$0xff]
        %v292 = vld [vmem:[%s277 + $0x60] sm:$0xff]
        %v293 = vld [vmem:[%s277 + $0x68] sm:$0xff]
        %v294 = vld [vmem:[%s277 + $0x70] sm:$0xff]
        %v295 = vld [vmem:[%s277 + $0x78] sm:$0xff]
        %v296 = vld [vmem:[%s277 + $0x80] sm:$0xff]
        %v297 = vld [vmem:[%s277 + $0x88] sm:$0xff]
        %v298 = vld [vmem:[%s277 + $0x90] sm:$0xff]
        %v299 = vld [vmem:[%s277 + $0x98] sm:$0xff]
        %v300 = vld [vmem:[%s277 + $0xa0] sm:$0xff]
        %v301 = vld [vmem:[%s277 + $0xa8] sm:$0xff]
        %v302 = vld [vmem:[%s277 + $0xb0] sm:$0xff]
        %v303 = vld [vmem:[%s277 + $0xb8] sm:$0xff]
        %v304 = vld [vmem:[%s277 + $0xc0] sm:$0xff]
        %v305 = vld [vmem:[%s277 + $0xc8] sm:$0xff]
        %v306 = vld [vmem:[%s277 + $0xd0] sm:$0xff]
        %v307 = vld [vmem:[%s277 + $0xd8] sm:$0xff]
        %v308 = vld [vmem:[%s277 + $0xe0] sm:$0xff]
        %v309 = vld [vmem:[%s277 + $0xe8] sm:$0xff]
        %v310 = vld [vmem:[%s277 + $0xf0] sm:$0xff]
        %v311 = vld [vmem:[%s277 + $0xf8] sm:$0xff]
        %v312 = vld [vmem:[%s1] sm:$0xf]
        %v313 = vld [vmem:[%s2] sm:$0x1]
        %v315 = vperm.slane %v313, 0
        %vm317 = vcmask 31744
        %v319 = vsel %vm317, %v280, 0
        %v322 = vsel %vm317, %v281, 0
        %v325 = vsel %vm317, %v282, 0
        %v328 = vsel %vm317, %v283, 0
        %v331 = vsel %vm317, %v284, 0
        %v334 = vsel %vm317, %v285, 0
        %v337 = vsel %vm317, %v286, 0
        %v340 = vsel %vm317, %v287, 0
        %v343 = vsel %vm317, %v288, 0
        %v346 = vsel %vm317, %v289, 0
        %v349 = vsel %vm317, %v290, 0
        %v352 = vsel %vm317, %v291, 0
        %v355 = vsel %vm317, %v292, 0
        %v358 = vsel %vm317, %v293, 0
        %v361 = vsel %vm317, %v294, 0
        %v364 = vsel %vm317, %v295, 0
        %v367 = vsel %vm317, %v296, 0
        %v370 = vsel %vm317, %v297, 0
        %v373 = vsel %vm317, %v298, 0
        %v376 = vsel %vm317, %v299, 0
        %v379 = vsel %vm317, %v300, 0
        %v382 = vsel %vm317, %v301, 0
        %v385 = vsel %vm317, %v302, 0
        %v388 = vsel %vm317, %v303, 0
        %v391 = vsel %vm317, %v304, 0
        %v394 = vsel %vm317, %v305, 0
        %v397 = vsel %vm317, %v306, 0
        %v400 = vsel %vm317, %v307, 0
        %v403 = vsel %vm317, %v308, 0
        %v406 = vsel %vm317, %v309, 0
        %v409 = vsel %vm317, %v310, 0
        %v412 = vsel %vm317, %v311, 0
        %vm414 = vcmask 1043456
        %v416 = vsel %vm414, %v312, 0
        %418 = vmatpush.msra.mxu0 0.0
        %419 = vmatpush.msra.mxu0 0.0
        %420 = vmatpush.msra.mxu0 0.0
        %421 = vmatpush.msra.mxu0 0.0
        %422 = vmatpush.msra.mxu0 0.0
        %423 = vmatpush.msra.mxu0 0.0
        %424 = vmatpush.msra.mxu0 0.0
        %425 = vmatpush.msra.mxu0 0.0
        %426 = vmatpush.msra.mxu0 0.0
        %427 = vmatpush.msra.mxu0 0.0
        %428 = vmatpush.msra.mxu0 0.0
        %429 = vmatpush.msra.mxu0 0.0
        %430 = vmatpush.msra.mxu0 0.0
        %431 = vmatpush.msra.mxu0 0.0
        %432 = vmatpush.msra.mxu0 0.0
        %433 = vmatpush.msra.mxu0 %v416
        %434 = vmatmul.f32.gmra.mxu0 %v319
        %v435 = vpop.f32.mrf.mxu0
        %v436 = vadd.f32 %v315, %v435
        %437 = vmatmul.f32.gmra.mxu0 %v322
        %v438 = vpop.f32.mrf.mxu0
        %v439 = vadd.f32 %v315, %v438
        %440 = vmatmul.f32.gmra.mxu0 %v325
        %v441 = vpop.f32.mrf.mxu0
        %v442 = vadd.f32 %v315, %v441
        %443 = vmatmul.f32.gmra.mxu0 %v328
        %v444 = vpop.f32.mrf.mxu0
        %v445 = vadd.f32 %v315, %v444
        %446 = vmatmul.f32.gmra.mxu0 %v331
        %v447 = vpop.f32.mrf.mxu0
        %v448 = vadd.f32 %v315, %v447
        %449 = vmatmul.f32.gmra.mxu0 %v334
        %v450 = vpop.f32.mrf.mxu0
        %v451 = vadd.f32 %v315, %v450
        %452 = vmatmul.f32.gmra.mxu0 %v337
        %v453 = vpop.f32.mrf.mxu0
        %v454 = vadd.f32 %v315, %v453
        %455 = vmatmul.f32.gmra.mxu0 %v340
        %v456 = vpop.f32.mrf.mxu0
        %v457 = vadd.f32 %v315, %v456
        %458 = vmatmul.f32.gmra.mxu0 %v343
        %v459 = vpop.f32.mrf.mxu0
        %v460 = vadd.f32 %v315, %v459
        %461 = vmatmul.f32.gmra.mxu0 %v346
        %v462 = vpop.f32.mrf.mxu0
        %v463 = vadd.f32 %v315, %v462
        %464 = vmatmul.f32.gmra.mxu0 %v349
        %v465 = vpop.f32.mrf.mxu0
        %v466 = vadd.f32 %v315, %v465
        %467 = vmatmul.f32.gmra.mxu0 %v352
        %v468 = vpop.f32.mrf.mxu0
        %v469 = vadd.f32 %v315, %v468
        %470 = vmatmul.f32.gmra.mxu0 %v355
        %v471 = vpop.f32.mrf.mxu0
        %v472 = vadd.f32 %v315, %v471
        %473 = vmatmul.f32.gmra.mxu0 %v358
        %v474 = vpop.f32.mrf.mxu0
        %v475 = vadd.f32 %v315, %v474
        %476 = vmatmul.f32.gmra.mxu0 %v361
        %v477 = vpop.f32.mrf.mxu0
        %v478 = vadd.f32 %v315, %v477
        %479 = vmatmul.f32.gmra.mxu0 %v364
        %v480 = vpop.f32.mrf.mxu0
        %v481 = vadd.f32 %v315, %v480
        %482 = vmatmul.f32.gmra.mxu0 %v367
        %v483 = vpop.f32.mrf.mxu0
        %v484 = vadd.f32 %v315, %v483
        %485 = vmatmul.f32.gmra.mxu0 %v370
        %v486 = vpop.f32.mrf.mxu0
        %v487 = vadd.f32 %v315, %v486
        %488 = vmatmul.f32.gmra.mxu0 %v373
        %v489 = vpop.f32.mrf.mxu0
        %v490 = vadd.f32 %v315, %v489
        %491 = vmatmul.f32.gmra.mxu0 %v376
        %v492 = vpop.f32.mrf.mxu0
        %v493 = vadd.f32 %v315, %v492
        %494 = vmatmul.f32.gmra.mxu0 %v379
        %v495 = vpop.f32.mrf.mxu0
        %v496 = vadd.f32 %v315, %v495
        %497 = vmatmul.f32.gmra.mxu0 %v382
        %v498 = vpop.f32.mrf.mxu0
        %v499 = vadd.f32 %v315, %v498
        %500 = vmatmul.f32.gmra.mxu0 %v385
        %v501 = vpop.f32.mrf.mxu0
        %v502 = vadd.f32 %v315, %v501
        %503 = vmatmul.f32.gmra.mxu0 %v388
        %v504 = vpop.f32.mrf.mxu0
        %v505 = vadd.f32 %v315, %v504
        %506 = vmatmul.f32.gmra.mxu0 %v391
        %v507 = vpop.f32.mrf.mxu0
        %v508 = vadd.f32 %v315, %v507
        %509 = vmatmul.f32.gmra.mxu0 %v394
        %v510 = vpop.f32.mrf.mxu0
        %v511 = vadd.f32 %v315, %v510
        %512 = vmatmul.f32.gmra.mxu0 %v397
        %v513 = vpop.f32.mrf.mxu0
        %v514 = vadd.f32 %v315, %v513
        %515 = vmatmul.f32.gmra.mxu0 %v400
        %v516 = vpop.f32.mrf.mxu0
        %v517 = vadd.f32 %v315, %v516
        %518 = vmatmul.f32.gmra.mxu0 %v403
        %v519 = vpop.f32.mrf.mxu0
        %v520 = vadd.f32 %v315, %v519
        %521 = vmatmul.f32.gmra.mxu0 %v406
        %v522 = vpop.f32.mrf.mxu0
        %v523 = vadd.f32 %v315, %v522
        %524 = vmatmul.f32.gmra.mxu0 %v409
        %v525 = vpop.f32.mrf.mxu0
        %v526 = vadd.f32 %v315, %v525
        %527 = vmatmul.f32.gmra.mxu0 %v412
        %v528 = vpop.f32.mrf.mxu0
        %v529 = vadd.f32 %v315, %v528
        %530 = vdwg.mxu0
        %vm531 = vcmp.gt.f32.partialorder %v436, 0.0
        %vm532 = vcmp.gt.f32.partialorder %v439, 0.0
        %vm533 = vcmp.gt.f32.partialorder %v442, 0.0
        %vm534 = vcmp.gt.f32.partialorder %v445, 0.0
        %vm535 = vcmp.gt.f32.partialorder %v448, 0.0
        %vm536 = vcmp.gt.f32.partialorder %v451, 0.0
        %vm537 = vcmp.gt.f32.partialorder %v454, 0.0
        %vm538 = vcmp.gt.f32.partialorder %v457, 0.0
        %vm539 = vcmp.gt.f32.partialorder %v460, 0.0
        %vm540 = vcmp.gt.f32.partialorder %v463, 0.0
        %vm541 = vcmp.gt.f32.partialorder %v466, 0.0
        %vm542 = vcmp.gt.f32.partialorder %v469, 0.0
        %vm543 = vcmp.gt.f32.partialorder %v472, 0.0
        %vm544 = vcmp.gt.f32.partialorder %v475, 0.0
        %vm545 = vcmp.gt.f32.partialorder %v478, 0.0
        %vm546 = vcmp.gt.f32.partialorder %v481, 0.0
        %vm547 = vcmp.gt.f32.partialorder %v484, 0.0
        %vm548 = vcmp.gt.f32.partialorder %v487, 0.0
        %vm549 = vcmp.gt.f32.partialorder %v490, 0.0
        %vm550 = vcmp.gt.f32.partialorder %v493, 0.0
        %vm551 = vcmp.gt.f32.partialorder %v496, 0.0
        %vm552 = vcmp.gt.f32.partialorder %v499, 0.0
        %vm553 = vcmp.gt.f32.partialorder %v502, 0.0
        %vm554 = vcmp.gt.f32.partialorder %v505, 0.0
        %vm555 = vcmp.gt.f32.partialorder %v508, 0.0
        %vm556 = vcmp.gt.f32.partialorder %v511, 0.0
        %vm557 = vcmp.gt.f32.partialorder %v514, 0.0
        %vm558 = vcmp.gt.f32.partialorder %v517, 0.0
        %vm559 = vcmp.gt.f32.partialorder %v520, 0.0
        %vm560 = vcmp.gt.f32.partialorder %v523, 0.0
        %vm561 = vcmp.gt.f32.partialorder %v526, 0.0
        %vm562 = vcmp.gt.f32.partialorder %v529, 0.0
        %v563 = vmul.f32 %v436, 0.01
        %v564 = vmul.f32 %v439, 0.01
        %v565 = vmul.f32 %v442, 0.01
        %v566 = vmul.f32 %v445, 0.01
        %v567 = vmul.f32 %v448, 0.01
        %v568 = vmul.f32 %v451, 0.01
        %v569 = vmul.f32 %v454, 0.01
        %v570 = vmul.f32 %v457, 0.01
        %v571 = vmul.f32 %v460, 0.01
        %v572 = vmul.f32 %v463, 0.01
        %v573 = vmul.f32 %v466, 0.01
        %v574 = vmul.f32 %v469, 0.01
        %v575 = vmul.f32 %v472, 0.01
        %v576 = vmul.f32 %v475, 0.01
        %v577 = vmul.f32 %v478, 0.01
        %v578 = vmul.f32 %v481, 0.01
        %v579 = vmul.f32 %v484, 0.01
        %v580 = vmul.f32 %v487, 0.01
        %v581 = vmul.f32 %v490, 0.01
        %v582 = vmul.f32 %v493, 0.01
        %v583 = vmul.f32 %v496, 0.01
        %v584 = vmul.f32 %v499, 0.01
        %v585 = vmul.f32 %v502, 0.01
        %v586 = vmul.f32 %v505, 0.01
        %v587 = vmul.f32 %v508, 0.01
        %v588 = vmul.f32 %v511, 0.01
        %v589 = vmul.f32 %v514, 0.01
        %v590 = vmul.f32 %v517, 0.01
        %v591 = vmul.f32 %v520, 0.01
        %v592 = vmul.f32 %v523, 0.01
        %v593 = vmul.f32 %v526, 0.01
        %v594 = vmul.f32 %v529, 0.01
        %v595 = vsel %vm531, %v436, %v563
        %v596 = vsel %vm532, %v439, %v564
        %v597 = vsel %vm533, %v442, %v565
        %v598 = vsel %vm534, %v445, %v566
        %v599 = vsel %vm535, %v448, %v567
        %v600 = vsel %vm536, %v451, %v568
        %v601 = vsel %vm537, %v454, %v569
        %v602 = vsel %vm538, %v457, %v570
        %v603 = vsel %vm539, %v460, %v571
        %v604 = vsel %vm540, %v463, %v572
        %v605 = vsel %vm541, %v466, %v573
        %v606 = vsel %vm542, %v469, %v574
        %v607 = vsel %vm543, %v472, %v575
        %v608 = vsel %vm544, %v475, %v576
        %v609 = vsel %vm545, %v478, %v577
        %v610 = vsel %vm546, %v481, %v578
        %v611 = vsel %vm547, %v484, %v579
        %v612 = vsel %vm548, %v487, %v580
        %v613 = vsel %vm549, %v490, %v581
        %v614 = vsel %vm550, %v493, %v582
        %v615 = vsel %vm551, %v496, %v583
        %v616 = vsel %vm552, %v499, %v584
        %v617 = vsel %vm553, %v502, %v585
        %v618 = vsel %vm554, %v505, %v586
        %v619 = vsel %vm555, %v508, %v587
        %v620 = vsel %vm556, %v511, %v588
        %v621 = vsel %vm557, %v514, %v589
        %v622 = vsel %vm558, %v517, %v590
        %v623 = vsel %vm559, %v520, %v591
        %v624 = vsel %vm560, %v523, %v592
        %v625 = vsel %vm561, %v526, %v593
        %v626 = vsel %vm562, %v529, %v594
        %v627 = vld [vmem:[%s3] sm:$0xff]
        %v628 = vld [vmem:[%s3 + $0x8] sm:$0xff]
        %v629 = vld [vmem:[%s3 + $0x10] sm:$0xff]
        %v630 = vld [vmem:[%s3 + $0x18] sm:$0xff]
        %v631 = vld [vmem:[%s3 + $0x20] sm:$0xff]
        %v632 = vld [vmem:[%s3 + $0x28] sm:$0xff]
        %v633 = vld [vmem:[%s3 + $0x30] sm:$0xff]
        %v634 = vld [vmem:[%s3 + $0x38] sm:$0xff]
        %v635 = vld [vmem:[%s3 + $0x40] sm:$0xff]
        %v636 = vld [vmem:[%s3 + $0x48] sm:$0xff]
        %v637 = vld [vmem:[%s3 + $0x50] sm:$0xff]
        %v638 = vld [vmem:[%s3 + $0x58] sm:$0xff]
        %v639 = vld [vmem:[%s3 + $0x60] sm:$0xff]
        %v640 = vld [vmem:[%s3 + $0x68] sm:$0xff]
        %v641 = vld [vmem:[%s3 + $0x70] sm:$0xff]
        %v642 = vld [vmem:[%s3 + $0x78] sm:$0xff]
        %v643 = vld [vmem:[%s4] sm:$0x1]
        %v645 = vperm.slane %v643, 0
        %647 = vmatpush.msra.mxu0 %v642
        %648 = vmatpush.msra.mxu0 %v641
        %649 = vmatpush.msra.mxu0 %v640
        %650 = vmatpush.msra.mxu0 %v639
        %651 = vmatpush.msra.mxu0 %v638
        %652 = vmatpush.msra.mxu0 %v637
        %653 = vmatpush.msra.mxu0 %v636
        %654 = vmatpush.msra.mxu0 %v635
        %655 = vmatpush.msra.mxu0 %v634
        %656 = vmatpush.msra.mxu0 %v633
        %657 = vmatpush.msra.mxu0 %v632
        %658 = vmatpush.msra.mxu0 %v631
        %659 = vmatpush.msra.mxu0 %v630
        %660 = vmatpush.msra.mxu0 %v629
        %661 = vmatpush.msra.mxu0 %v628
        %662 = vmatpush.msra.mxu0 %v627
        %663 = vmatmul.f32.gmra.mxu0 %v595
        %v664 = vpop.f32.mrf.mxu0
        %v665 = vadd.f32 %v645, %v664
        %666 = vmatmul.f32.gmra.mxu0 %v596
        %v667 = vpop.f32.mrf.mxu0
        %v668 = vadd.f32 %v645, %v667
        %669 = vmatmul.f32.gmra.mxu0 %v597
        %v670 = vpop.f32.mrf.mxu0
        %v671 = vadd.f32 %v645, %v670
        %672 = vmatmul.f32.gmra.mxu0 %v598
        %v673 = vpop.f32.mrf.mxu0
        %v674 = vadd.f32 %v645, %v673
        %675 = vmatmul.f32.gmra.mxu0 %v599
        %v676 = vpop.f32.mrf.mxu0
        %v677 = vadd.f32 %v645, %v676
        %678 = vmatmul.f32.gmra.mxu0 %v600
        %v679 = vpop.f32.mrf.mxu0
        %v680 = vadd.f32 %v645, %v679
        %681 = vmatmul.f32.gmra.mxu0 %v601
        %v682 = vpop.f32.mrf.mxu0
        %v683 = vadd.f32 %v645, %v682
        %684 = vmatmul.f32.gmra.mxu0 %v602
        %v685 = vpop.f32.mrf.mxu0
        %v686 = vadd.f32 %v645, %v685
        %687 = vmatmul.f32.gmra.mxu0 %v603
        %v688 = vpop.f32.mrf.mxu0
        %v689 = vadd.f32 %v645, %v688
        %690 = vmatmul.f32.gmra.mxu0 %v604
        %v691 = vpop.f32.mrf.mxu0
        %v692 = vadd.f32 %v645, %v691
        %693 = vmatmul.f32.gmra.mxu0 %v605
        %v694 = vpop.f32.mrf.mxu0
        %v695 = vadd.f32 %v645, %v694
        %696 = vmatmul.f32.gmra.mxu0 %v606
        %v697 = vpop.f32.mrf.mxu0
        %v698 = vadd.f32 %v645, %v697
        %699 = vmatmul.f32.gmra.mxu0 %v607
        %v700 = vpop.f32.mrf.mxu0
        %v701 = vadd.f32 %v645, %v700
        %702 = vmatmul.f32.gmra.mxu0 %v608
        %v703 = vpop.f32.mrf.mxu0
        %v704 = vadd.f32 %v645, %v703
        %705 = vmatmul.f32.gmra.mxu0 %v609
        %v706 = vpop.f32.mrf.mxu0
        %v707 = vadd.f32 %v645, %v706
        %708 = vmatmul.f32.gmra.mxu0 %v610
        %v709 = vpop.f32.mrf.mxu0
        %v710 = vadd.f32 %v645, %v709
        %711 = vmatmul.f32.gmra.mxu0 %v611
        %v712 = vpop.f32.mrf.mxu0
        %v713 = vadd.f32 %v645, %v712
        %714 = vmatmul.f32.gmra.mxu0 %v612
        %v715 = vpop.f32.mrf.mxu0
        %v716 = vadd.f32 %v645, %v715
        %717 = vmatmul.f32.gmra.mxu0 %v613
        %v718 = vpop.f32.mrf.mxu0
        %v719 = vadd.f32 %v645, %v718
        %720 = vmatmul.f32.gmra.mxu0 %v614
        %v721 = vpop.f32.mrf.mxu0
        %v722 = vadd.f32 %v645, %v721
        %723 = vmatmul.f32.gmra.mxu0 %v615
        %v724 = vpop.f32.mrf.mxu0
        %v725 = vadd.f32 %v645, %v724
        %726 = vmatmul.f32.gmra.mxu0 %v616
        %v727 = vpop.f32.mrf.mxu0
        %v728 = vadd.f32 %v645, %v727
        %729 = vmatmul.f32.gmra.mxu0 %v617
        %v730 = vpop.f32.mrf.mxu0
        %v731 = vadd.f32 %v645, %v730
        %732 = vmatmul.f32.gmra.mxu0 %v618
        %v733 = vpop.f32.mrf.mxu0
        %v734 = vadd.f32 %v645, %v733
        %735 = vmatmul.f32.gmra.mxu0 %v619
        %v736 = vpop.f32.mrf.mxu0
        %v737 = vadd.f32 %v645, %v736
        %738 = vmatmul.f32.gmra.mxu0 %v620
        %v739 = vpop.f32.mrf.mxu0
        %v740 = vadd.f32 %v645, %v739
        %741 = vmatmul.f32.gmra.mxu0 %v621
        %v742 = vpop.f32.mrf.mxu0
        %v743 = vadd.f32 %v645, %v742
        %744 = vmatmul.f32.gmra.mxu0 %v622
        %v745 = vpop.f32.mrf.mxu0
        %v746 = vadd.f32 %v645, %v745
        %747 = vmatmul.f32.gmra.mxu0 %v623
        %v748 = vpop.f32.mrf.mxu0
        %v749 = vadd.f32 %v645, %v748
        %750 = vmatmul.f32.gmra.mxu0 %v624
        %v751 = vpop.f32.mrf.mxu0
        %v752 = vadd.f32 %v645, %v751
        %753 = vmatmul.f32.gmra.mxu0 %v625
        %v754 = vpop.f32.mrf.mxu0
        %v755 = vadd.f32 %v645, %v754
        %756 = vmatmul.f32.gmra.mxu0 %v626
        %v757 = vpop.f32.mrf.mxu0
        %v758 = vadd.f32 %v645, %v757
        %759 = vdwg.mxu0
        %v760 = vld [vmem:[%s5] sm:$0xf]
        %v761 = vld [vmem:[%s6] sm:$0x1]
        %v763 = vperm.slane %v761, 0
        %v766 = vsel %vm414, %v760, 0
        %768 = vmatpush.msra.mxu0 0.0
        %769 = vmatpush.msra.mxu0 0.0
        %770 = vmatpush.msra.mxu0 0.0
        %771 = vmatpush.msra.mxu0 0.0
        %772 = vmatpush.msra.mxu0 0.0
        %773 = vmatpush.msra.mxu0 0.0
        %774 = vmatpush.msra.mxu0 0.0
        %775 = vmatpush.msra.mxu0 0.0
        %776 = vmatpush.msra.mxu0 0.0
        %777 = vmatpush.msra.mxu0 0.0
        %778 = vmatpush.msra.mxu0 0.0
        %779 = vmatpush.msra.mxu0 0.0
        %780 = vmatpush.msra.mxu0 0.0
        %781 = vmatpush.msra.mxu0 0.0
        %782 = vmatpush.msra.mxu0 0.0
        %783 = vmatpush.msra.mxu0 %v766
        %784 = vmatmul.f32.gmra.mxu0 %v319
        %v785 = vpop.f32.mrf.mxu0
        %v786 = vadd.f32 %v763, %v785
        %787 = vmatmul.f32.gmra.mxu0 %v322
        %v788 = vpop.f32.mrf.mxu0
        %v789 = vadd.f32 %v763, %v788
        %790 = vmatmul.f32.gmra.mxu0 %v325
        %v791 = vpop.f32.mrf.mxu0
        %v792 = vadd.f32 %v763, %v791
        %793 = vmatmul.f32.gmra.mxu0 %v328
        %v794 = vpop.f32.mrf.mxu0
        %v795 = vadd.f32 %v763, %v794
        %796 = vmatmul.f32.gmra.mxu0 %v331
        %v797 = vpop.f32.mrf.mxu0
        %v798 = vadd.f32 %v763, %v797
        %799 = vmatmul.f32.gmra.mxu0 %v334
        %v800 = vpop.f32.mrf.mxu0
        %v801 = vadd.f32 %v763, %v800
        %802 = vmatmul.f32.gmra.mxu0 %v337
        %v803 = vpop.f32.mrf.mxu0
        %v804 = vadd.f32 %v763, %v803
        %805 = vmatmul.f32.gmra.mxu0 %v340
        %v806 = vpop.f32.mrf.mxu0
        %v807 = vadd.f32 %v763, %v806
        %808 = vmatmul.f32.gmra.mxu0 %v343
        %v809 = vpop.f32.mrf.mxu0
        %v810 = vadd.f32 %v763, %v809
        %811 = vmatmul.f32.gmra.mxu0 %v346
        %v812 = vpop.f32.mrf.mxu0
        %v813 = vadd.f32 %v763, %v812
        %814 = vmatmul.f32.gmra.mxu0 %v349
        %v815 = vpop.f32.mrf.mxu0
        %v816 = vadd.f32 %v763, %v815
        %817 = vmatmul.f32.gmra.mxu0 %v352
        %v818 = vpop.f32.mrf.mxu0
        %v819 = vadd.f32 %v763, %v818
        %820 = vmatmul.f32.gmra.mxu0 %v355
        %v821 = vpop.f32.mrf.mxu0
        %v822 = vadd.f32 %v763, %v821
        %823 = vmatmul.f32.gmra.mxu0 %v358
        %v824 = vpop.f32.mrf.mxu0
        %v825 = vadd.f32 %v763, %v824
        %826 = vmatmul.f32.gmra.mxu0 %v361
        %v827 = vpop.f32.mrf.mxu0
        %v828 = vadd.f32 %v763, %v827
        %829 = vmatmul.f32.gmra.mxu0 %v364
        %v830 = vpop.f32.mrf.mxu0
        %v831 = vadd.f32 %v763, %v830
        %832 = vmatmul.f32.gmra.mxu0 %v367
        %v833 = vpop.f32.mrf.mxu0
        %v834 = vadd.f32 %v763, %v833
        %835 = vmatmul.f32.gmra.mxu0 %v370
        %v836 = vpop.f32.mrf.mxu0
        %v837 = vadd.f32 %v763, %v836
        %838 = vmatmul.f32.gmra.mxu0 %v373
        %v839 = vpop.f32.mrf.mxu0
        %v840 = vadd.f32 %v763, %v839
        %841 = vmatmul.f32.gmra.mxu0 %v376
        %v842 = vpop.f32.mrf.mxu0
        %v843 = vadd.f32 %v763, %v842
        %844 = vmatmul.f32.gmra.mxu0 %v379
        %v845 = vpop.f32.mrf.mxu0
        %v846 = vadd.f32 %v763, %v845
        %847 = vmatmul.f32.gmra.mxu0 %v382
        %v848 = vpop.f32.mrf.mxu0
        %v849 = vadd.f32 %v763, %v848
        %850 = vmatmul.f32.gmra.mxu0 %v385
        %v851 = vpop.f32.mrf.mxu0
        %v852 = vadd.f32 %v763, %v851
        %853 = vmatmul.f32.gmra.mxu0 %v388
        %v854 = vpop.f32.mrf.mxu0
        %v855 = vadd.f32 %v763, %v854
        %856 = vmatmul.f32.gmra.mxu0 %v391
        %v857 = vpop.f32.mrf.mxu0
        %v858 = vadd.f32 %v763, %v857
        %859 = vmatmul.f32.gmra.mxu0 %v394
        %v860 = vpop.f32.mrf.mxu0
        %v861 = vadd.f32 %v763, %v860
        %862 = vmatmul.f32.gmra.mxu0 %v397
        %v863 = vpop.f32.mrf.mxu0
        %v864 = vadd.f32 %v763, %v863
        %865 = vmatmul.f32.gmra.mxu0 %v400
        %v866 = vpop.f32.mrf.mxu0
        %v867 = vadd.f32 %v763, %v866
        %868 = vmatmul.f32.gmra.mxu0 %v403
        %v869 = vpop.f32.mrf.mxu0
        %v870 = vadd.f32 %v763, %v869
        %871 = vmatmul.f32.gmra.mxu0 %v406
        %v872 = vpop.f32.mrf.mxu0
        %v873 = vadd.f32 %v763, %v872
        %874 = vmatmul.f32.gmra.mxu0 %v409
        %v875 = vpop.f32.mrf.mxu0
        %v876 = vadd.f32 %v763, %v875
        %877 = vmatmul.f32.gmra.mxu0 %v412
        %v878 = vpop.f32.mrf.mxu0
        %v879 = vadd.f32 %v763, %v878
        %880 = vdwg.mxu0
        %v881 = vadd.f32 %v665, %v786
        %v882 = vadd.f32 %v668, %v789
        %v883 = vadd.f32 %v671, %v792
        %v884 = vadd.f32 %v674, %v795
        %v885 = vadd.f32 %v677, %v798
        %v886 = vadd.f32 %v680, %v801
        %v887 = vadd.f32 %v683, %v804
        %v888 = vadd.f32 %v686, %v807
        %v889 = vadd.f32 %v689, %v810
        %v890 = vadd.f32 %v692, %v813
        %v891 = vadd.f32 %v695, %v816
        %v892 = vadd.f32 %v698, %v819
        %v893 = vadd.f32 %v701, %v822
        %v894 = vadd.f32 %v704, %v825
        %v895 = vadd.f32 %v707, %v828
        %v896 = vadd.f32 %v710, %v831
        %v897 = vadd.f32 %v713, %v834
        %v898 = vadd.f32 %v716, %v837
        %v899 = vadd.f32 %v719, %v840
        %v900 = vadd.f32 %v722, %v843
        %v901 = vadd.f32 %v725, %v846
        %v902 = vadd.f32 %v728, %v849
        %v903 = vadd.f32 %v731, %v852
        %v904 = vadd.f32 %v734, %v855
        %v905 = vadd.f32 %v737, %v858
        %v906 = vadd.f32 %v740, %v861
        %v907 = vadd.f32 %v743, %v864
        %v908 = vadd.f32 %v746, %v867
        %v909 = vadd.f32 %v749, %v870
        %v910 = vadd.f32 %v752, %v873
        %v911 = vadd.f32 %v755, %v876
        %v912 = vadd.f32 %v758, %v879
        %vm913 = vcmp.gt.f32.partialorder %v881, 0.0
        %vm914 = vcmp.gt.f32.partialorder %v882, 0.0
        %vm915 = vcmp.gt.f32.partialorder %v883, 0.0
        %vm916 = vcmp.gt.f32.partialorder %v884, 0.0
        %vm917 = vcmp.gt.f32.partialorder %v885, 0.0
        %vm918 = vcmp.gt.f32.partialorder %v886, 0.0
        %vm919 = vcmp.gt.f32.partialorder %v887, 0.0
        %vm920 = vcmp.gt.f32.partialorder %v888, 0.0
        %vm921 = vcmp.gt.f32.partialorder %v889, 0.0
        %vm922 = vcmp.gt.f32.partialorder %v890, 0.0
        %vm923 = vcmp.gt.f32.partialorder %v891, 0.0
        %vm924 = vcmp.gt.f32.partialorder %v892, 0.0
        %vm925 = vcmp.gt.f32.partialorder %v893, 0.0
        %vm926 = vcmp.gt.f32.partialorder %v894, 0.0
        %vm927 = vcmp.gt.f32.partialorder %v895, 0.0
        %vm928 = vcmp.gt.f32.partialorder %v896, 0.0
        %vm929 = vcmp.gt.f32.partialorder %v897, 0.0
        %vm930 = vcmp.gt.f32.partialorder %v898, 0.0
        %vm931 = vcmp.gt.f32.partialorder %v899, 0.0
        %vm932 = vcmp.gt.f32.partialorder %v900, 0.0
        %vm933 = vcmp.gt.f32.partialorder %v901, 0.0
        %vm934 = vcmp.gt.f32.partialorder %v902, 0.0
        %vm935 = vcmp.gt.f32.partialorder %v903, 0.0
        %vm936 = vcmp.gt.f32.partialorder %v904, 0.0
        %vm937 = vcmp.gt.f32.partialorder %v905, 0.0
        %vm938 = vcmp.gt.f32.partialorder %v906, 0.0
        %vm939 = vcmp.gt.f32.partialorder %v907, 0.0
        %vm940 = vcmp.gt.f32.partialorder %v908, 0.0
        %vm941 = vcmp.gt.f32.partialorder %v909, 0.0
        %vm942 = vcmp.gt.f32.partialorder %v910, 0.0
        %vm943 = vcmp.gt.f32.partialorder %v911, 0.0
        %vm944 = vcmp.gt.f32.partialorder %v912, 0.0
        %v945 = vmul.f32 %v881, 0.01
        %v946 = vmul.f32 %v882, 0.01
        %v947 = vmul.f32 %v883, 0.01
        %v948 = vmul.f32 %v884, 0.01
        %v949 = vmul.f32 %v885, 0.01
        %v950 = vmul.f32 %v886, 0.01
        %v951 = vmul.f32 %v887, 0.01
        %v952 = vmul.f32 %v888, 0.01
        %v953 = vmul.f32 %v889, 0.01
        %v954 = vmul.f32 %v890, 0.01
        %v955 = vmul.f32 %v891, 0.01
        %v956 = vmul.f32 %v892, 0.01
        %v957 = vmul.f32 %v893, 0.01
        %v958 = vmul.f32 %v894, 0.01
        %v959 = vmul.f32 %v895, 0.01
        %v960 = vmul.f32 %v896, 0.01
        %v961 = vmul.f32 %v897, 0.01
        %v962 = vmul.f32 %v898, 0.01
        %v963 = vmul.f32 %v899, 0.01
        %v964 = vmul.f32 %v900, 0.01
        %v965 = vmul.f32 %v901, 0.01
        %v966 = vmul.f32 %v902, 0.01
        %v967 = vmul.f32 %v903, 0.01
        %v968 = vmul.f32 %v904, 0.01
        %v969 = vmul.f32 %v905, 0.01
        %v970 = vmul.f32 %v906, 0.01
        %v971 = vmul.f32 %v907, 0.01
        %v972 = vmul.f32 %v908, 0.01
        %v973 = vmul.f32 %v909, 0.01
        %v974 = vmul.f32 %v910, 0.01
        %v975 = vmul.f32 %v911, 0.01
        %v976 = vmul.f32 %v912, 0.01
        %v977 = vsel %vm913, %v881, %v945
        %v978 = vsel %vm914, %v882, %v946
        %v979 = vsel %vm915, %v883, %v947
        %v980 = vsel %vm916, %v884, %v948
        %v981 = vsel %vm917, %v885, %v949
        %v982 = vsel %vm918, %v886, %v950
        %v983 = vsel %vm919, %v887, %v951
        %v984 = vsel %vm920, %v888, %v952
        %v985 = vsel %vm921, %v889, %v953
        %v986 = vsel %vm922, %v890, %v954
        %v987 = vsel %vm923, %v891, %v955
        %v988 = vsel %vm924, %v892, %v956
        %v989 = vsel %vm925, %v893, %v957
        %v990 = vsel %vm926, %v894, %v958
        %v991 = vsel %vm927, %v895, %v959
        %v992 = vsel %vm928, %v896, %v960
        %v993 = vsel %vm929, %v897, %v961
        %v994 = vsel %vm930, %v898, %v962
        %v995 = vsel %vm931, %v899, %v963
        %v996 = vsel %vm932, %v900, %v964
        %v997 = vsel %vm933, %v901, %v965
        %v998 = vsel %vm934, %v902, %v966
        %v999 = vsel %vm935, %v903, %v967
        %v1000 = vsel %vm936, %v904, %v968
        %v1001 = vsel %vm937, %v905, %v969
        %v1002 = vsel %vm938, %v906, %v970
        %v1003 = vsel %vm939, %v907, %v971
        %v1004 = vsel %vm940, %v908, %v972
        %v1005 = vsel %vm941, %v909, %v973
        %v1006 = vsel %vm942, %v910, %v974
        %v1007 = vsel %vm943, %v911, %v975
        %v1008 = vsel %vm944, %v912, %v976
        %1009 = vst [vmem:[%s272] sm:$0xff] %v977
        %1010 = vst [vmem:[%s272 + $0x8] sm:$0xff] %v978
        %1011 = vst [vmem:[%s272 + $0x10] sm:$0xff] %v979
        %1012 = vst [vmem:[%s272 + $0x18] sm:$0xff] %v980
        %1013 = vst [vmem:[%s272 + $0x20] sm:$0xff] %v981
        %1014 = vst [vmem:[%s272 + $0x28] sm:$0xff] %v982
        %1015 = vst [vmem:[%s272 + $0x30] sm:$0xff] %v983
        %1016 = vst [vmem:[%s272 + $0x38] sm:$0xff] %v984
        %1017 = vst [vmem:[%s272 + $0x40] sm:$0xff] %v985
        %1018 = vst [vmem:[%s272 + $0x48] sm:$0xff] %v986
        %1019 = vst [vmem:[%s272 + $0x50] sm:$0xff] %v987
        %1020 = vst [vmem:[%s272 + $0x58] sm:$0xff] %v988
        %1021 = vst [vmem:[%s272 + $0x60] sm:$0xff] %v989
        %1022 = vst [vmem:[%s272 + $0x68] sm:$0xff] %v990
        %1023 = vst [vmem:[%s272 + $0x70] sm:$0xff] %v991
        %1024 = vst [vmem:[%s272 + $0x78] sm:$0xff] %v992
        %1025 = vst [vmem:[%s272 + $0x80] sm:$0xff] %v993
        %1026 = vst [vmem:[%s272 + $0x88] sm:$0xff] %v994
        %1027 = vst [vmem:[%s272 + $0x90] sm:$0xff] %v995
        %1028 = vst [vmem:[%s272 + $0x98] sm:$0xff] %v996
        %1029 = vst [vmem:[%s272 + $0xa0] sm:$0xff] %v997
        %1030 = vst [vmem:[%s272 + $0xa8] sm:$0xff] %v998
        %1031 = vst [vmem:[%s272 + $0xb0] sm:$0xff] %v999
        %1032 = vst [vmem:[%s272 + $0xb8] sm:$0xff] %v1000
        %1033 = vst [vmem:[%s272 + $0xc0] sm:$0xff] %v1001
        %1034 = vst [vmem:[%s272 + $0xc8] sm:$0xff] %v1002
        %1035 = vst [vmem:[%s272 + $0xd0] sm:$0xff] %v1003
        %1036 = vst [vmem:[%s272 + $0xd8] sm:$0xff] %v1004
        %1037 = vst [vmem:[%s272 + $0xe0] sm:$0xff] %v1005
        %1038 = vst [vmem:[%s272 + $0xe8] sm:$0xff] %v1006
        %1039 = vst [vmem:[%s272 + $0xf0] sm:$0xff] %v1007
        %1040 = vst [vmem:[%s272 + $0xf8] sm:$0xff] %v1008
        %s1041 = sand.u32 %s181, 1
        %s1042 = scalar_lea.sflag [#allocation3], %s1041
        %s1043 = sand.u32 %s181, 1
        %s1044 = smul.addr %s1043, 256
        %s1045 = scalar_lea.vmem [#allocation2], %s1044
        // Predicated region
        $region49: #{tpu_custom_call.1} parent=47 // pred_check
          %p1046 = pneg %p191
        $region50: #{tpu_custom_call.1} parent=47 // pred_check_branch
          %1048 = sbr.rel (%p1046) target = $region52
        $region51: #{tpu_custom_call.1} parent=47 // pred_region
          %s1049 = smul.u32 32, %s21
          %1051 = vsyncadd %s1042, 0
          %s1052 = smul.addr %s1049, 8
          %s1053 = scalar_lea.hbm %s7, %s1052
          %s1054 = sshll.u32 %s1045, 4
          %s1055 = int_to_ptr.vmem [resolvable:$true] %s1054
          %s1056 = sshll.u32 %s1053, 4
          %s1057 = int_to_ptr.hbm [resolvable:$true] %s1056
          %1062 = dma.vmem_to_hbm [thread:$0]  %s1055, 4096, %s1057, %s1042, 128, 128, 8
        $region52: #{tpu_custom_call.1} parent=47 // pred_fallthru
          _
      $region48: #{tpu_custom_call.1} parent=5 // pred_fallthru
        _
      %p1063 = scmp.le.s32.totalorder 2, %s16
      // Predicated region
      $region53: #{tpu_custom_call.1} parent=5 // pred_check
        %p1064 = pneg %p1063
      $region54: #{tpu_custom_call.1} parent=5 // pred_check_branch
        %1066 = sbr.rel (%p1064) target = $region56
      $region55: #{tpu_custom_call.1} parent=5 // pred_region
        %s1067 = ssub.s32 %s16, 2
        // Predicated region
        $region57: #{tpu_custom_call.1} parent=55 // pred_check
          %p1068 = pneg %p197
        $region58: #{tpu_custom_call.1} parent=55 // pred_check_branch
          %1070 = sbr.rel (%p1068) target = $region60
        $region59: #{tpu_custom_call.1} parent=55 // pred_region
          %s1071 = sand.u32 %s182, 1
          %s1072 = scalar_lea.sflag [#allocation3], %s1071
          %s1073 = sand.u32 %s182, 1
          %s1074 = smul.addr %s1073, 256
          %s1075 = scalar_lea.vmem [#allocation2], %s1074
          %1077 = dma.done %s1072, 4096
        $region60: #{tpu_custom_call.1} parent=55 // pred_fallthru
          _
      $region56: #{tpu_custom_call.1} parent=5 // pred_fallthru
        _
    $region6: #{tpu_custom_call.1} parent=1 // loop_footer
      %s20 = sadd.s32 1, %s16
    $region7: #{tpu_custom_call.1} parent=1 // loop_footer_branch
      %15 = sbr.rel target = $region3
    $region8: #{tpu_custom_call.1} parent=1 // loop_exit
      _
    %1078 = vsyncpa [#allocation3], 1
    %s1079 = scalar_lea.sflag [#allocation3], 1
    %1080 = vsyncpa %s1079, 1

</llo_original>
